<compile_context>
chip_gen: v7x
topology: tpu7x:2x2x1
jax: 0.10.0
libtpu: 0.0.40
codegen_flags: <defaults>
</compile_context>

<pallas_src>
import functools

import numpy as np
import jax
import jax.numpy as jnp
from jax import lax
from jax.experimental import pallas as pl
from jax.experimental.pallas import tpu as pltpu

try:  # C Hungarian solver if present (orders of magnitude faster than Python)
    from scipy.optimize import linear_sum_assignment as _scipy_lsa
except Exception:  # pragma: no cover - keep the script self-contained
    _scipy_lsa = None


def _round_up(x, m):
    return ((x + m - 1) // m) * m


# ----------------------------- Pallas kernel ------------------------------- #
def _matcher_cost_kernel(logits_ref, pred_ref, tgt_ref, labels_ref, cost_ref,
                         *, w_class, w_bbox, w_giou):
    b, tn, c_pad = logits_ref.shape
    t_pad = labels_ref.shape[-1]

    # ---- classification cost: -w_class * softmax(logits)[:, labels] ----
    # Split softmax: e @ onehot on the MXU (bf16 operands, f32 accumulate), then
    # one per-row approx reciprocal instead of a [TN, C_pad]-wide divide.
    logits = logits_ref[...]                                   # [B, TN, C_pad] f32
    m = jnp.max(logits, axis=-1, keepdims=True)
    e = jnp.exp(logits - m)                                    # f32 (v5e-safe VPU/EUP)
    row_sum = jnp.sum(e, axis=-1, keepdims=True)               # [B, TN, 1]

    labels = labels_ref[...]                                   # [B, 1, T_pad] int32
    iota_c = lax.broadcasted_iota(jnp.int32, (b, c_pad, t_pad), 1)
    onehot = (iota_c == labels).astype(jnp.bfloat16)           # built in-kernel, no HBM onehot
    num = jnp.einsum("bnc,bct->bnt", e.astype(jnp.bfloat16), onehot,
                     preferred_element_type=jnp.float32)       # [B, TN, T_pad]
    inv_sum = pl.reciprocal(row_sum, approx=True)              # EUP slot
    cost_class = (-w_class) * num * inv_sum

    # ---- per-prediction / per-target precomputed features ----
    pf = pred_ref[...]                                         # [B, TN, 8] cx,cy,w,h,x0,y0,x1,y1
    tf = tgt_ref[...]                                          # [B, 8, T_pad] same order
    pcx, pcy, pw, ph, px0, py0, px1, py1 = (pf[:, :, k:k + 1] for k in range(8))  # [B,TN,1]
    tcx, tcy, tw, th, tx0, ty0, tx1, ty1 = (tf[:, k:k + 1, :] for k in range(8))  # [B,1,T]

    # ---- L1 box cost (torch.cdist p=1 on cxcywh) ----
    cost_bbox = (jnp.abs(pcx - tcx) + jnp.abs(pcy - tcy)
                 + jnp.abs(pw - tw) + jnp.abs(ph - th))        # [B, TN, T]

    # ---- generalized IoU cost ----
    area_p = pw * ph
    area_t = tw * th

    iw = jnp.maximum(jnp.minimum(px1, tx1) - jnp.maximum(px0, tx0), 0.0)
    ih = jnp.maximum(jnp.minimum(py1, ty1) - jnp.maximum(py0, ty0), 0.0)
    inter = iw * ih
    union = area_p + area_t - inter
    inv_union = pl.reciprocal(jnp.maximum(union, 1e-9), approx=True)     # EUP
    iou = inter * inv_union

    ew = jnp.maximum(jnp.maximum(px1, tx1) - jnp.minimum(px0, tx0), 0.0)
    eh = jnp.maximum(jnp.maximum(py1, ty1) - jnp.minimum(py0, ty0), 0.0)
    enclose = ew * eh
    inv_enclose = pl.reciprocal(jnp.maximum(enclose, 1e-9), approx=True)  # EUP
    giou = iou - (enclose - union) * inv_enclose

    cost_ref[...] = w_bbox * cost_bbox + cost_class - w_giou * giou


def _choose_tiling(bs, nq, c_pad, t_pad):
    """Pick (b_tile, bs_pad, tile_n, nq_pad) under a conservative VMEM budget."""
    b_tile = bs if bs <= 8 else 8              # amortize per-step fixed overhead
    bs_pad = _round_up(bs, b_tile)
    nq_pad = _round_up(nq, 8)

    # Double-buffered logits/out blocks + ~6 live [B,TN,T] f32 GIoU temporaries
    # + in-kernel bf16 one-hot.  Stay well under v7x's 32 MiB scoped default
    # (v5e/v6e have 128 MiB VMEM, so this mostly lets big tiles through there).
    budget = 20 * 1024 * 1024

    def step_bytes(tn):
        dbuf = 2 * 4 * b_tile * tn * (c_pad + t_pad)
        temps = 6 * 4 * b_tile * tn * t_pad
        onehot = 2 * b_tile * c_pad * t_pad
        return dbuf + temps + onehot

    tile_n = nq_pad
    while tile_n > 8 and step_bytes(tile_n) > budget:
        tile_n = _round_up((tile_n + 1) // 2, 8)

    # v7x has 2 TensorCores: guarantee >=2 parallel grid steps when a single
    # (batch-tile, query-tile) would otherwise cover the whole problem.
    if bs_pad // b_tile == 1 and nq_pad // max(tile_n, 1) <= 1 and nq_pad >= 16:
        tile_n = _round_up((nq_pad + 1) // 2, 8)

    nq_pad = _round_up(nq_pad, tile_n)
    return b_tile, bs_pad, tile_n, nq_pad


def _compute_cost_blocks(logits, pred_feat, tgt_feat, labels,
                         w_class, w_bbox, w_giou, b_tile, tile_n):
    bs_pad, nq_pad, c_pad = logits.shape
    t_pad = labels.shape[-1]
    grid = (bs_pad // b_tile, nq_pad // tile_n)

    kernel = functools.partial(_matcher_cost_kernel,
                               w_class=float(w_class),
                               w_bbox=float(w_bbox),
                               w_giou=float(w_giou))

    flops = int(2 * bs_pad * nq_pad * c_pad * t_pad + 40 * bs_pad * nq_pad * t_pad)
    transcendentals = int(bs_pad * nq_pad * (c_pad + 3 * t_pad))
    bytes_accessed = int(4 * (bs_pad * nq_pad * c_pad + bs_pad * nq_pad * 8
                              + bs_pad * 8 * t_pad + bs_pad * t_pad
                              + bs_pad * nq_pad * t_pad))

    # NOTE: for very large class counts on v6e one could add
    # pipeline_mode=pl.Buffered(3) on the logits BlockSpec to keep the big
    # logits DMA hidden behind the short compute phase.
    return pl.pallas_call(
        kernel,
        out_shape=jax.ShapeDtypeStruct((bs_pad, nq_pad, t_pad), jnp.float32),
        grid_spec=pltpu.PrefetchScalarGridSpec(
            num_scalar_prefetch=0,
            grid=grid,
            in_specs=[
                pl.BlockSpec((b_tile, tile_n, c_pad), lambda b, n: (b, n, 0)),   # logits
                pl.BlockSpec((b_tile, tile_n, 8), lambda b, n: (b, n, 0)),       # pred feats
                pl.BlockSpec((b_tile, 8, t_pad), lambda b, n: (b, 0, 0)),        # tgt feats
                pl.BlockSpec((b_tile, 1, t_pad), lambda b, n: (b, 0, 0)),        # labels
            ],
            out_specs=pl.BlockSpec((b_tile, tile_n, t_pad), lambda b, n: (b, n, 0)),
        ),
        compiler_params=pltpu.CompilerParams(
            dimension_semantics=("parallel", "parallel"),
            vmem_limit_bytes=32 * 1024 * 1024,
        ),
        cost_estimate=pl.CostEstimate(flops=flops,
                                      transcendentals=transcendentals,
                                      bytes_accessed=bytes_accessed),
    )(logits, pred_feat, tgt_feat, labels)


# ---------------------- Host-side Hungarian assignment --------------------- #
def _linear_sum_assignment_py(cost):
    """Kuhn-Munkres (shortest augmenting path with potentials), NumPy/host fallback."""
    cost = np.asarray(cost, dtype=np.float64)
    transposed = False
    if cost.shape[0] > cost.shape[1]:
        cost = cost.T
        transposed = True
    n, m = cost.shape  # n <= m
    INF = float("inf")
    u = np.zeros(n + 1)
    v = np.zeros(m + 1)
    p = np.zeros(m + 1, dtype=np.int64)
    way = np.zeros(m + 1, dtype=np.int64)
    for i in range(1, n + 1):
        p[0] = i
        j0 = 0
        minv = np.full(m + 1, INF)
        used = np.zeros(m + 1, dtype=bool)
        while True:
            used[j0] = True
            i0 = p[j0]
            delta = INF
            j1 = 0
            for j in range(1, m + 1):
                if not used[j]:
                    cur = cost[i0 - 1, j - 1] - u[i0] - v[j]
                    if cur < minv[j]:
                        minv[j] = cur
                        way[j] = j0
                    if minv[j] < delta:
                        delta = minv[j]
                        j1 = j
            for j in range(m + 1):
                if used[j]:
                    u[p[j]] += delta
                    v[j] -= delta
                else:
                    minv[j] -= delta
            j0 = j1
            if p[j0] == 0:
                break
        while j0 != 0:
            j1 = way[j0]
            p[j0] = p[j1]
            j0 = j1
    rows, cols = [], []
    for j in range(1, m + 1):
        if p[j] != 0:
            rows.append(p[j] - 1)
            cols.append(j - 1)
    rows = np.asarray(rows, dtype=np.int64)
    cols = np.asarray(cols, dtype=np.int64)
    if transposed:
        rows, cols = cols, rows
    order = np.argsort(rows)
    return rows[order], cols[order]


def _assignment(cost):
    if _scipy_lsa is not None:
        r, c = _scipy_lsa(cost)
        return np.asarray(r, np.int64), np.asarray(c, np.int64)
    return _linear_sum_assignment_py(cost)


# ------------------------------- Matcher API -------------------------------- #
def hungarian_matcher(outputs, targets, cost_class=1.0, cost_bbox=1.0,
                      cost_giou=1.0):
    pred_logits = outputs["pred_logits"].astype(jnp.float32)   # [bs, nq, C]
    pred_boxes = outputs["pred_boxes"].astype(jnp.float32)     # [bs, nq, 4]
    bs, nq, num_classes = pred_logits.shape
    sizes = [int(t["boxes"].shape[0]) for t in targets]

    if sum(sizes) == 0:
        empty = [(np.zeros(0, np.int64), np.zeros(0, np.int64)) for _ in sizes]
        return empty, None

    # Padded dims: classes & targets to lane multiples (128), queries to sublanes (8).
    c_pad = max(_round_up(num_classes, 128), 128)
    t_pad = max(_round_up(max(sizes), 128), 128)
    b_tile, bs_pad, tile_n, nq_pad = _choose_tiling(bs, nq, c_pad, t_pad)

    # --- logits: pad classes/queries/batch with -1e9 (exp->0 or uniform row) ---
    logits = jnp.pad(
        pred_logits,
        ((0, bs_pad - bs), (0, nq_pad - nq), (0, c_pad - num_classes)),
        constant_values=-1e9)

    # --- per-prediction features (cx,cy,w,h,x0,y0,x1,y1), computed once in XLA ---
    pcx, pcy, pw, ph = (pred_boxes[..., k] for k in range(4))
    pred_feat = jnp.stack([pcx, pcy, pw, ph,
                           pcx - 0.5 * pw, pcy - 0.5 * ph,
                           pcx + 0.5 * pw, pcy + 0.5 * ph], axis=-1)   # [bs, nq, 8]
    # Zero padding is safe: all in-kernel denominators are clamped with 1e-9,
    # and padded rows/images are sliced away before the assignment.
    pred_feat = jnp.pad(pred_feat, ((0, bs_pad - bs), (0, nq_pad - nq), (0, 0)))

    # --- target features + labels: built once on host, single H2D each ---
    dummy = np.array([0.5, 0.5, 1.0, 1.0, 0.0, 0.0, 1.0, 1.0], np.float32)
    tgt_feat_np = np.broadcast_to(dummy[None, :, None], (bs_pad, 8, t_pad)).copy()
    labels_np = np.full((bs_pad, 1, t_pad), -1, np.int32)   # -1 never matches a class
    for i, t in enumerate(targets):
        s = sizes[i]
        if s == 0:
            continue
        boxes = np.asarray(t["boxes"], np.float32).reshape(s, 4)
        cx, cy, w, h = boxes[:, 0], boxes[:, 1], boxes[:, 2], boxes[:, 3]
        tgt_feat_np[i, :, :s] = np.stack(
            [cx, cy, w, h,
             cx - 0.5 * w, cy - 0.5 * h, cx + 0.5 * w, cy + 0.5 * h], axis=0)
        labels_np[i, 0, :s] = np.asarray(t["labels"], np.int64)
    tgt_feat = jnp.asarray(tgt_feat_np)          # [bs_pad, 8, T_pad]
    labels = jnp.asarray(labels_np)              # [bs_pad, 1, T_pad] int32

    # --- Pallas kernel: per-image diagonal cost blocks only ---
    C_blocks = _compute_cost_blocks(logits, pred_feat, tgt_feat, labels,
                                    cost_class, cost_bbox, cost_giou,
                                    b_tile, tile_n)
    # Slice to the real extent on-device before D2H to minimize the copy.
    t_max = max(sizes)
    C_dev = jax.block_until_ready(C_blocks[:bs, :nq, :t_max])
    C_np = np.asarray(C_dev)                     # [bs, nq, t_max]

    indices = []
    for i, s in enumerate(sizes):
        if s == 0:
            indices.append((np.zeros(0, np.int64), np.zeros(0, np.int64)))
            continue
        ri, ci = _assignment(C_np[i, :, :s])
        indices.append((ri.astype(np.int64), ci.astype(np.int64)))
    return indices, C_dev


# ------------------------- Plain-JAX reference check ------------------------ #
def _ref_cost_matrix(logits, boxes, tgt_ids, tgt_bbox, wc, wb, wg):
    prob = jax.nn.softmax(logits, axis=-1)
    cc = -prob[:, tgt_ids]
    cb = jnp.sum(jnp.abs(boxes[:, None, :] - tgt_bbox[None, :, :]), axis=-1)

    def to_xyxy(b):
        cx, cy, w, h = b[..., 0], b[..., 1], b[..., 2], b[..., 3]
        return jnp.stack([cx - 0.5 * w, cy - 0.5 * h, cx + 0.5 * w, cy + 0.5 * h], -1)

    b1, b2 = to_xyxy(boxes), to_xyxy(tgt_bbox)
    a1 = (b1[:, 2] - b1[:, 0]) * (b1[:, 3] - b1[:, 1])
    a2 = (b2[:, 2] - b2[:, 0]) * (b2[:, 3] - b2[:, 1])
    lt = jnp.maximum(b1[:, None, :2], b2[None, :, :2])
    rb = jnp.minimum(b1[:, None, 2:], b2[None, :, 2:])
    wh = jnp.clip(rb - lt, 0)
    inter = wh[..., 0] * wh[..., 1]
    union = a1[:, None] + a2[None, :] - inter
    iou = inter / union
    lt2 = jnp.minimum(b1[:, None, :2], b2[None, :, :2])
    rb2 = jnp.maximum(b1[:, None, 2:], b2[None, :, 2:])
    wh2 = jnp.clip(rb2 - lt2, 0)
    area = wh2[..., 0] * wh2[..., 1]
    giou = iou - (area - union) / area
    return wb * cb + wc * cc + wg * (-giou)


if __name__ == "__main__":
    bs, num_queries, num_classes = 2, 8, 32
    sizes = [3, 5]  # num target boxes per image

    key = jax.random.PRNGKey(0)
    k1, k2, k3, k4 = jax.random.split(key, 4)

    pred_logits = jax.random.normal(k1, (bs, num_queries, num_classes), jnp.float32)
    pred_boxes = jax.nn.sigmoid(jax.random.normal(k2, (bs, num_queries, 4), jnp.float32))

    label_keys = jax.random.split(k3, len(sizes))
    box_keys = jax.random.split(k4, len(sizes))
    targets = [
        {"labels": jax.random.randint(label_keys[i], (s,), 0, num_classes),
         "boxes": jax.random.uniform(box_keys[i], (s, 4), jnp.float32,
                                     minval=0.1, maxval=0.6)}
        for i, s in enumerate(sizes)
    ]

    outputs = {"pred_logits": pred_logits, "pred_boxes": pred_boxes}
    indices, C = hungarian_matcher(outputs, targets,
                                   cost_class=1.0, cost_bbox=1.0, cost_giou=1.0)
    jax.block_until_ready(C)

    # Correctness check of the Pallas diagonal cost blocks vs plain JAX.
    # (tolerance loosened: bf16 MXU operands + pl.reciprocal(approx=True))
    C_np = np.asarray(C)  # [bs, nq, max(sizes)]
    for i, s in enumerate(sizes):
        C_ref = _ref_cost_matrix(pred_logits[i], pred_boxes[i],
                                 targets[i]["labels"], targets[i]["boxes"],
                                 1.0, 1.0, 1.0)
        np.testing.assert_allclose(C_np[i, :, :s], np.asarray(C_ref),
                                   rtol=2e-2, atol=2e-2)

    # sanity: one (i, j) pair list per batch element, of length min(nq, size)
    for (ri, ci), s in zip(indices, sizes):
        assert ri.dtype == np.int64 and ci.dtype == np.int64
        assert len(ri) == len(ci) == min(num_queries, s)

    print("KERNEL_OK")
</pallas_src>

<mosaic_0001>
module attributes {stable_mosaic.version = 11 : i64} {
  func.func @_matcher_cost_kernel(%arg0: i32, %arg1: i32, %arg2: memref<2x8x128xf32, #tpu.memory_space<vmem>>, %arg3: memref<2x8x8xf32, #tpu.memory_space<vmem>>, %arg4: memref<2x8x128xf32, #tpu.memory_space<vmem>>, %arg5: memref<2x1x128xi32, #tpu.memory_space<vmem>>, %arg6: memref<2x8x128xf32, #tpu.memory_space<vmem>>) attributes {dimension_semantics = [#tpu.dimension_semantics<parallel>, #tpu.dimension_semantics<parallel>], iteration_bounds = array<i64: 1, 1>, scalar_prefetch = 0 : i64, scratch_operands = 0 : i64, tpu.core_type = #tpu.core_type<tc>, window_params = [{transform_indices = @transform_0, window_bounds = array<i64: 2, 8, 128>}, {transform_indices = @transform_1, window_bounds = array<i64: 2, 8, 8>}, {transform_indices = @transform_2, window_bounds = array<i64: 2, 8, 128>}, {transform_indices = @transform_3, window_bounds = array<i64: 2, 1, 128>}, {transform_indices = @transform_4, window_bounds = array<i64: 2, 8, 128>}]} {
    %c0 = arith.constant 0 : index
    %c0_0 = arith.constant 0 : index
    %c0_1 = arith.constant 0 : index
    %0 = vector.load %arg2[%c0, %c0_0, %c0_1] : memref<2x8x128xf32, #tpu.memory_space<vmem>>, vector<2x8x128xf32>
    %cst = arith.constant dense<0xFF800000> : vector<2x8xf32>
    %1 = vector.multi_reduction <maximumf>, %0, %cst [2] : vector<2x8x128xf32> to vector<2x8xf32>
    %2 = vector.shape_cast %1 : vector<2x8xf32> to vector<2x8x1xf32>
    %3 = vector.broadcast %2 : vector<2x8x1xf32> to vector<2x8x128xf32>
    %4 = arith.subf %0, %3 : vector<2x8x128xf32>
    %5 = math.exp %4 : vector<2x8x128xf32>
    %cst_2 = arith.constant dense<0.000000e+00> : vector<2x8xf32>
    %6 = vector.multi_reduction <add>, %5, %cst_2 [2] : vector<2x8x128xf32> to vector<2x8xf32>
    %7 = vector.shape_cast %6 : vector<2x8xf32> to vector<2x8x1xf32>
    %c0_3 = arith.constant 0 : index
    %c0_4 = arith.constant 0 : index
    %c0_5 = arith.constant 0 : index
    %8 = vector.load %arg5[%c0_3, %c0_4, %c0_5] : memref<2x1x128xi32, #tpu.memory_space<vmem>>, vector<2x1x128xi32>
    %9 = tpu.iota {dimensions = array<i32: 1>} : vector<2x128x128xi32>
    %10 = vector.broadcast %8 : vector<2x1x128xi32> to vector<2x128x128xi32>
    %11 = arith.cmpi eq, %9, %10 : vector<2x128x128xi32>
    %12 = arith.extui %11 : vector<2x128x128xi1> to vector<2x128x128xi32>
    %13 = arith.sitofp %12 : vector<2x128x128xi32> to vector<2x128x128xf32>
    %14 = arith.truncf %13 : vector<2x128x128xf32> to vector<2x128x128xbf16>
    %15 = arith.truncf %5 : vector<2x8x128xf32> to vector<2x8x128xbf16>
    "tpu.trace_start"() <{level = 10 : i32, message = "bnc,bct->bnt"}> : () -> ()
    %cst_6 = arith.constant dense<0.000000e+00> : vector<2x8x128xf32>
    %16 = tpu.matmul %15, %14, %cst_6 {dimension_numbers = #tpu.dot_dimension_numbers<[2], [1], [1], [2], [0, 0, 0, 1, 1, 2], [0], [0]>} : vector<2x8x128xbf16>, vector<2x128x128xbf16>, vector<2x8x128xf32> -> vector<2x8x128xf32>
    "tpu.trace_stop"() : () -> ()
    %17 = tpu.reciprocal %7 {approx = true} : vector<2x8x1xf32> -> vector<2x8x1xf32>
    %cst_7 = arith.constant -1.000000e+00 : f32
    %18 = vector.broadcast %cst_7 : f32 to vector<2x8x128xf32>
    %19 = arith.mulf %18, %16 : vector<2x8x128xf32>
    %20 = vector.broadcast %17 : vector<2x8x1xf32> to vector<2x8x128xf32>
    %21 = arith.mulf %19, %20 : vector<2x8x128xf32>
    %c0_8 = arith.constant 0 : index
    %c0_9 = arith.constant 0 : index
    %c0_10 = arith.constant 0 : index
    %22 = vector.load %arg3[%c0_8, %c0_9, %c0_10] : memref<2x8x8xf32, #tpu.memory_space<vmem>>, vector<2x8x8xf32>
    %c0_11 = arith.constant 0 : index
    %c0_12 = arith.constant 0 : index
    %c0_13 = arith.constant 0 : index
    %23 = vector.load %arg4[%c0_11, %c0_12, %c0_13] : memref<2x8x128xf32, #tpu.memory_space<vmem>>, vector<2x8x128xf32>
    %24 = vector.extract_strided_slice %22 {offsets = [0, 0, 0], sizes = [2, 8, 1], strides = [1, 1, 1]} : vector<2x8x8xf32> to vector<2x8x1xf32>
    %25 = vector.extract_strided_slice %22 {offsets = [0, 0, 1], sizes = [2, 8, 1], strides = [1, 1, 1]} : vector<2x8x8xf32> to vector<2x8x1xf32>
    %26 = vector.extract_strided_slice %22 {offsets = [0, 0, 2], sizes = [2, 8, 1], strides = [1, 1, 1]} : vector<2x8x8xf32> to vector<2x8x1xf32>
    %27 = vector.extract_strided_slice %22 {offsets = [0, 0, 3], sizes = [2, 8, 1], strides = [1, 1, 1]} : vector<2x8x8xf32> to vector<2x8x1xf32>
    %28 = vector.extract_strided_slice %22 {offsets = [0, 0, 4], sizes = [2, 8, 1], strides = [1, 1, 1]} : vector<2x8x8xf32> to vector<2x8x1xf32>
    %29 = vector.extract_strided_slice %22 {offsets = [0, 0, 5], sizes = [2, 8, 1], strides = [1, 1, 1]} : vector<2x8x8xf32> to vector<2x8x1xf32>
    %30 = vector.extract_strided_slice %22 {offsets = [0, 0, 6], sizes = [2, 8, 1], strides = [1, 1, 1]} : vector<2x8x8xf32> to vector<2x8x1xf32>
    %31 = vector.extract_strided_slice %22 {offsets = [0, 0, 7], sizes = [2, 8, 1], strides = [1, 1, 1]} : vector<2x8x8xf32> to vector<2x8x1xf32>
    %32 = vector.extract_strided_slice %23 {offsets = [0, 0, 0], sizes = [2, 1, 128], strides = [1, 1, 1]} : vector<2x8x128xf32> to vector<2x1x128xf32>
    %33 = vector.extract_strided_slice %23 {offsets = [0, 1, 0], sizes = [2, 1, 128], strides = [1, 1, 1]} : vector<2x8x128xf32> to vector<2x1x128xf32>
    %34 = vector.extract_strided_slice %23 {offsets = [0, 2, 0], sizes = [2, 1, 128], strides = [1, 1, 1]} : vector<2x8x128xf32> to vector<2x1x128xf32>
    %35 = vector.extract_strided_slice %23 {offsets = [0, 3, 0], sizes = [2, 1, 128], strides = [1, 1, 1]} : vector<2x8x128xf32> to vector<2x1x128xf32>
    %36 = vector.extract_strided_slice %23 {offsets = [0, 4, 0], sizes = [2, 1, 128], strides = [1, 1, 1]} : vector<2x8x128xf32> to vector<2x1x128xf32>
    %37 = vector.extract_strided_slice %23 {offsets = [0, 5, 0], sizes = [2, 1, 128], strides = [1, 1, 1]} : vector<2x8x128xf32> to vector<2x1x128xf32>
    %38 = vector.extract_strided_slice %23 {offsets = [0, 6, 0], sizes = [2, 1, 128], strides = [1, 1, 1]} : vector<2x8x128xf32> to vector<2x1x128xf32>
    %39 = vector.extract_strided_slice %23 {offsets = [0, 7, 0], sizes = [2, 1, 128], strides = [1, 1, 1]} : vector<2x8x128xf32> to vector<2x1x128xf32>
    %40 = vector.broadcast %24 : vector<2x8x1xf32> to vector<2x8x128xf32>
    %41 = vector.broadcast %32 : vector<2x1x128xf32> to vector<2x8x128xf32>
    %42 = arith.subf %40, %41 : vector<2x8x128xf32>
    %43 = math.absf %42 : vector<2x8x128xf32>
    %44 = vector.broadcast %25 : vector<2x8x1xf32> to vector<2x8x128xf32>
    %45 = vector.broadcast %33 : vector<2x1x128xf32> to vector<2x8x128xf32>
    %46 = arith.subf %44, %45 : vector<2x8x128xf32>
    %47 = math.absf %46 : vector<2x8x128xf32>
    %48 = arith.addf %43, %47 : vector<2x8x128xf32>
    %49 = vector.broadcast %26 : vector<2x8x1xf32> to vector<2x8x128xf32>
    %50 = vector.broadcast %34 : vector<2x1x128xf32> to vector<2x8x128xf32>
    %51 = arith.subf %49, %50 : vector<2x8x128xf32>
    %52 = math.absf %51 : vector<2x8x128xf32>
    %53 = arith.addf %48, %52 : vector<2x8x128xf32>
    %54 = vector.broadcast %27 : vector<2x8x1xf32> to vector<2x8x128xf32>
    %55 = vector.broadcast %35 : vector<2x1x128xf32> to vector<2x8x128xf32>
    %56 = arith.subf %54, %55 : vector<2x8x128xf32>
    %57 = math.absf %56 : vector<2x8x128xf32>
    %58 = arith.addf %53, %57 : vector<2x8x128xf32>
    %59 = arith.mulf %26, %27 : vector<2x8x1xf32>
    %60 = arith.mulf %34, %35 : vector<2x1x128xf32>
    %61 = vector.broadcast %30 : vector<2x8x1xf32> to vector<2x8x128xf32>
    %62 = vector.broadcast %38 : vector<2x1x128xf32> to vector<2x8x128xf32>
    %63 = arith.minimumf %61, %62 : vector<2x8x128xf32>
    %64 = vector.broadcast %28 : vector<2x8x1xf32> to vector<2x8x128xf32>
    %65 = vector.broadcast %36 : vector<2x1x128xf32> to vector<2x8x128xf32>
    %66 = arith.maximumf %64, %65 : vector<2x8x128xf32>
    %67 = arith.subf %63, %66 : vector<2x8x128xf32>
    %cst_14 = arith.constant 0.000000e+00 : f32
    %68 = vector.broadcast %cst_14 : f32 to vector<2x8x128xf32>
    %69 = arith.maximumf %67, %68 : vector<2x8x128xf32>
    %70 = vector.broadcast %31 : vector<2x8x1xf32> to vector<2x8x128xf32>
    %71 = vector.broadcast %39 : vector<2x1x128xf32> to vector<2x8x128xf32>
    %72 = arith.minimumf %70, %71 : vector<2x8x128xf32>
    %73 = vector.broadcast %29 : vector<2x8x1xf32> to vector<2x8x128xf32>
    %74 = vector.broadcast %37 : vector<2x1x128xf32> to vector<2x8x128xf32>
    %75 = arith.maximumf %73, %74 : vector<2x8x128xf32>
    %76 = arith.subf %72, %75 : vector<2x8x128xf32>
    %cst_15 = arith.constant 0.000000e+00 : f32
    %77 = vector.broadcast %cst_15 : f32 to vector<2x8x128xf32>
    %78 = arith.maximumf %76, %77 : vector<2x8x128xf32>
    %79 = arith.mulf %69, %78 : vector<2x8x128xf32>
    %80 = vector.broadcast %59 : vector<2x8x1xf32> to vector<2x8x128xf32>
    %81 = vector.broadcast %60 : vector<2x1x128xf32> to vector<2x8x128xf32>
    %82 = arith.addf %80, %81 : vector<2x8x128xf32>
    %83 = arith.subf %82, %79 : vector<2x8x128xf32>
    %cst_16 = arith.constant 9.99999971E-10 : f32
    %84 = vector.broadcast %cst_16 : f32 to vector<2x8x128xf32>
    %85 = arith.maximumf %83, %84 : vector<2x8x128xf32>
    %86 = tpu.reciprocal %85 {approx = true} : vector<2x8x128xf32> -> vector<2x8x128xf32>
    %87 = arith.mulf %79, %86 : vector<2x8x128xf32>
    %88 = vector.broadcast %30 : vector<2x8x1xf32> to vector<2x8x128xf32>
    %89 = vector.broadcast %38 : vector<2x1x128xf32> to vector<2x8x128xf32>
    %90 = arith.maximumf %88, %89 : vector<2x8x128xf32>
    %91 = vector.broadcast %28 : vector<2x8x1xf32> to vector<2x8x128xf32>
    %92 = vector.broadcast %36 : vector<2x1x128xf32> to vector<2x8x128xf32>
    %93 = arith.minimumf %91, %92 : vector<2x8x128xf32>
    %94 = arith.subf %90, %93 : vector<2x8x128xf32>
    %cst_17 = arith.constant 0.000000e+00 : f32
    %95 = vector.broadcast %cst_17 : f32 to vector<2x8x128xf32>
    %96 = arith.maximumf %94, %95 : vector<2x8x128xf32>
    %97 = vector.broadcast %31 : vector<2x8x1xf32> to vector<2x8x128xf32>
    %98 = vector.broadcast %39 : vector<2x1x128xf32> to vector<2x8x128xf32>
    %99 = arith.maximumf %97, %98 : vector<2x8x128xf32>
    %100 = vector.broadcast %29 : vector<2x8x1xf32> to vector<2x8x128xf32>
    %101 = vector.broadcast %37 : vector<2x1x128xf32> to vector<2x8x128xf32>
    %102 = arith.minimumf %100, %101 : vector<2x8x128xf32>
    %103 = arith.subf %99, %102 : vector<2x8x128xf32>
    %cst_18 = arith.constant 0.000000e+00 : f32
    %104 = vector.broadcast %cst_18 : f32 to vector<2x8x128xf32>
    %105 = arith.maximumf %103, %104 : vector<2x8x128xf32>
    %106 = arith.mulf %96, %105 : vector<2x8x128xf32>
    %cst_19 = arith.constant 9.99999971E-10 : f32
    %107 = vector.broadcast %cst_19 : f32 to vector<2x8x128xf32>
    %108 = arith.maximumf %106, %107 : vector<2x8x128xf32>
    %109 = tpu.reciprocal %108 {approx = true} : vector<2x8x128xf32> -> vector<2x8x128xf32>
    %110 = arith.subf %106, %83 : vector<2x8x128xf32>
    %111 = arith.mulf %110, %109 : vector<2x8x128xf32>
    %112 = arith.subf %87, %111 : vector<2x8x128xf32>
    %cst_20 = arith.constant 1.000000e+00 : f32
    %113 = vector.broadcast %cst_20 : f32 to vector<2x8x128xf32>
    %114 = arith.mulf %113, %58 : vector<2x8x128xf32>
    %115 = arith.addf %114, %21 : vector<2x8x128xf32>
    %cst_21 = arith.constant 1.000000e+00 : f32
    %116 = vector.broadcast %cst_21 : f32 to vector<2x8x128xf32>
    %117 = arith.mulf %116, %112 : vector<2x8x128xf32>
    %118 = arith.subf %115, %117 : vector<2x8x128xf32>
    %c0_22 = arith.constant 0 : index
    %c0_23 = arith.constant 0 : index
    %c0_24 = arith.constant 0 : index
    %119 = vector.load %arg6[%c0_22, %c0_23, %c0_24] : memref<2x8x128xf32, #tpu.memory_space<vmem>>, vector<2x8x128xf32>
    tpu.vector_store %arg6[%c0_22, %c0_23, %c0_24], %118 {strides = array<i32>} : memref<2x8x128xf32, #tpu.memory_space<vmem>>, vector<2x8x128xf32>,
    return
  }
  func.func @transform_0(%arg0: i32, %arg1: i32) -> (i32, i32, i32) {
    %c0_i32 = arith.constant 0 : i32
    %c0_i32_0 = arith.constant 0 : i32
    return %arg0, %arg1, %c0_i32 : i32, i32, i32
  }
  func.func @transform_1(%arg0: i32, %arg1: i32) -> (i32, i32, i32) {
    %c0_i32 = arith.constant 0 : i32
    %c0_i32_0 = arith.constant 0 : i32
    return %arg0, %arg1, %c0_i32 : i32, i32, i32
  }
  func.func @transform_2(%arg0: i32, %arg1: i32) -> (i32, i32, i32) {
    %c0_i32 = arith.constant 0 : i32
    %c0_i32_0 = arith.constant 0 : i32
    %c0_i32_1 = arith.constant 0 : i32
    return %arg0, %c0_i32, %c0_i32_0 : i32, i32, i32
  }
  func.func @transform_3(%arg0: i32, %arg1: i32) -> (i32, i32, i32) {
    %c0_i32 = arith.constant 0 : i32
    %c0_i32_0 = arith.constant 0 : i32
    %c0_i32_1 = arith.constant 0 : i32
    return %arg0, %c0_i32, %c0_i32_0 : i32, i32, i32
  }
  func.func @transform_4(%arg0: i32, %arg1: i32) -> (i32, i32, i32) {
    %c0_i32 = arith.constant 0 : i32
    %c0_i32_0 = arith.constant 0 : i32
    return %arg0, %arg1, %c0_i32 : i32, i32, i32
  }
}

</mosaic_0001>

<llo_original>
// kernel: tpu_custom_call.1
$region0: #{tpu_custom_call.1}
  #allocation0 [shape = 'u32[]', space=smem, size = 0x4, offset = 0x4, fixed_abs, tag = 'smem constant byte address 0x4 - core index']
  #allocation1 [shape = 'u32[144,128]{1,0:T(1,128)}', space=vmem, size = 0x12000, scoped, tag = 'internal scratch']
  %s0 = inlined_call_operand.hbm [shape: f32[2,8,128], index: 0, kind: input, shape index: {}]
  %s1 = inlined_call_operand.hbm [shape: f32[2,8,8], index: 1, kind: input, shape index: {}]
  %s2 = inlined_call_operand.hbm [shape: f32[2,8,128], index: 2, kind: input, shape index: {}]
  %s3 = inlined_call_operand.vmem [shape: s32[2,1,128], index: 3, kind: input, shape index: {}]
  %s4 = inlined_call_operand.hbm [shape: f32[2,8,128], index: 4, kind: output, shape index: {}]
  %s5 = sld [smem:[#allocation0]]
  $region38: #{tpu_custom_call.1} parent=0
    _
  %s7 = ssub.s32 1, %s5
  %s8 = scalar_select 0, %s7, %s5
  $region1: #{tpu_custom_call.1} parent=0
    #allocation2 [shape = 'u8[8192]{0}', space=vmem, size = 0x2000, scoped, tag = 'input window, operand 0, single buffered']
    #allocation3 [shape = 's32[1]{0}', space=sflag, size = 0x4, scoped, tag = 'scoped memory for tpu_custom_call.1']
    #allocation4 [shape = 's32[1]{0}', space=sflag, size = 0x4, scoped, tag = 'scoped memory for tpu_custom_call.1']
    #allocation5 [shape = 'u8[8192]{0}', space=vmem, size = 0x2000, scoped, tag = 'input window, operand 1, single buffered']
    #allocation6 [shape = 's32[1]{0}', space=sflag, size = 0x4, scoped, tag = 'scoped memory for tpu_custom_call.1']
    #allocation7 [shape = 'u8[8192]{0}', space=vmem, size = 0x2000, scoped, tag = 'input window, operand 2, single buffered']
    #allocation8 [shape = 'u8[8192]{0}', space=vmem, size = 0x2000, scoped, tag = 'output window, operand 0, single buffered']
    %9 = vsyncpa [#allocation3], 0
    %10 = vsyncpa [#allocation6], 0
    %11 = vsyncpa [#allocation4], 0
    // Predicated region
    $region2: #{tpu_custom_call.1} parent=1 // pred_check
      _
    $region3: #{tpu_custom_call.1} parent=1 // pred_check_branch
      %13 = sbr.rel (0) target = $region5
    $region4: #{tpu_custom_call.1} parent=1 // pred_region
      %s15 = ssub.s32 256, 256
      %16 = vsyncadd [#allocation3], %s15
      %s17 = sshll.u32 [#allocation2], 4
      %s18 = int_to_ptr.vmem [resolvable:$true] %s17
      %23 = dma.hbm_to_vmem [thread:$0]  %s0, 256, %s18, [#allocation3], 128, 128, 8
    $region5: #{tpu_custom_call.1} parent=1 // pred_fallthru
      _
    // Predicated region
    $region6: #{tpu_custom_call.1} parent=1 // pred_check
      _
    $region7: #{tpu_custom_call.1} parent=1 // pred_check_branch
      %25 = sbr.rel (0) target = $region9
    $region8: #{tpu_custom_call.1} parent=1 // pred_region
      %s27 = ssub.s32 256, 256
      %28 = vsyncadd [#allocation6], %s27
      %s29 = sshll.u32 [#allocation5], 4
      %s30 = int_to_ptr.vmem [resolvable:$true] %s29
      %35 = dma.hbm_to_vmem [thread:$0]  %s1, 256, %s30, [#allocation6], 128, 128, 8
    $region9: #{tpu_custom_call.1} parent=1 // pred_fallthru
      _
    // Predicated region
    $region10: #{tpu_custom_call.1} parent=1 // pred_check
      _
    $region11: #{tpu_custom_call.1} parent=1 // pred_check_branch
      %37 = sbr.rel (0) target = $region13
    $region12: #{tpu_custom_call.1} parent=1 // pred_region
      %s39 = ssub.s32 256, 256
      %40 = vsyncadd [#allocation6], %s39
      %s41 = sshll.u32 [#allocation7], 4
      %s42 = int_to_ptr.vmem [resolvable:$true] %s41
      %47 = dma.hbm_to_vmem [thread:$0]  %s2, 256, %s42, [#allocation6], 128, 128, 8
    $region13: #{tpu_custom_call.1} parent=1 // pred_fallthru
      _
    // Predicated region
    $region14: #{tpu_custom_call.1} parent=1 // pred_check
      _
    $region15: #{tpu_custom_call.1} parent=1 // pred_check_branch
      %49 = sbr.rel (0) target = $region17
    $region16: #{tpu_custom_call.1} parent=1 // pred_region
      _
    $region17: #{tpu_custom_call.1} parent=1 // pred_fallthru
      _
    // Predicated region
    $region18: #{tpu_custom_call.1} parent=1 // pred_check
      _
    $region19: #{tpu_custom_call.1} parent=1 // pred_check_branch
      %51 = sbr.rel (0) target = $region21
    $region20: #{tpu_custom_call.1} parent=1 // pred_region
      %52 = dma.done [#allocation3], 256
    $region21: #{tpu_custom_call.1} parent=1 // pred_fallthru
      _
    // Predicated region
    $region22: #{tpu_custom_call.1} parent=1 // pred_check
      _
    $region23: #{tpu_custom_call.1} parent=1 // pred_check_branch
      %54 = sbr.rel (0) target = $region25
    $region24: #{tpu_custom_call.1} parent=1 // pred_region
      %55 = dma.done [#allocation6], 256
    $region25: #{tpu_custom_call.1} parent=1 // pred_fallthru
      _
    // Predicated region
    $region26: #{tpu_custom_call.1} parent=1 // pred_check
      _
    $region27: #{tpu_custom_call.1} parent=1 // pred_check_branch
      %57 = sbr.rel (0) target = $region29
    $region28: #{tpu_custom_call.1} parent=1 // pred_region
      %58 = dma.done [#allocation6], 256
    $region29: #{tpu_custom_call.1} parent=1 // pred_fallthru
      _
    %v60 = vld [vmem:[#allocation2] sm:$0xff]
    %v61 = vld [vmem:[#allocation2 + $0x8] sm:$0xff]
    %62 = vmax.xlane.f32.xlu0 %v60
    %v63 = vpop.xlane.xlu0 %62
    %64 = vmax.xlane.f32.xlu0 %v61
    %v65 = vpop.xlane.xlu0 %64
    %v66 = vsub.f32 %v60, %v63
    %v67 = vsub.f32 %v61, %v65
    %v68 = vmul.f32 %v66, 1.442695
    %v69 = vpow.pop %v68
    %v70 = vmul.f32 %v67, 1.442695
    %v71 = vpow.pop %v70
    %72 = vadd.xlane.f32.xlu0 %v69
    %v73 = vpop.xlane.xlu0 %72
    %74 = vadd.xlane.f32.xlu0 %v71
    %v75 = vpop.xlane.xlu0 %74
    %v76 = vld [vmem:[%s3] sm:$0x1]
    %v77 = vld [vmem:[%s3 + $0x1] sm:$0x1]
    %v78 = vlaneseq
    %v79 = vshrl.u32 %v78, 7
    %v80 = vadd.s32 %v79, 8
    %v81 = vadd.s32 %v79, 16
    %v82 = vadd.s32 %v79, 24
    %v83 = vadd.s32 %v79, 32
    %v84 = vadd.s32 %v79, 40
    %v85 = vadd.s32 %v79, 48
    %v86 = vadd.s32 %v79, 56
    %v87 = vadd.s32 %v79, 64
    %v88 = vadd.s32 %v79, 72
    %v89 = vadd.s32 %v79, 80
    %v90 = vadd.s32 %v79, 88
    %v91 = vadd.s32 %v79, 96
    %v92 = vadd.s32 %v79, 104
    %v93 = vadd.s32 %v79, 112
    %v94 = vadd.s32 %v79, 120
    %v95 = vlaneseq
    %v96 = vshrl.u32 %v95, 7
    %v97 = vsub.s32 0, %v96
    %v98 = vrot.slane %v76, %v97
    %v99 = vlaneseq
    %v100 = vshrl.u32 %v99, 7
    %v101 = vsub.s32 0, %v100
    %v102 = vrot.slane %v77, %v101
    %vm103 = vcmp.eq.s32.totalorder %v79, %v98
    %vm104 = vcmp.eq.s32.totalorder %v80, %v98
    %vm105 = vcmp.eq.s32.totalorder %v81, %v98
    %vm106 = vcmp.eq.s32.totalorder %v82, %v98
    %vm107 = vcmp.eq.s32.totalorder %v83, %v98
    %vm108 = vcmp.eq.s32.totalorder %v84, %v98
    %vm109 = vcmp.eq.s32.totalorder %v85, %v98
    %vm110 = vcmp.eq.s32.totalorder %v86, %v98
    %vm111 = vcmp.eq.s32.totalorder %v87, %v98
    %vm112 = vcmp.eq.s32.totalorder %v88, %v98
    %vm113 = vcmp.eq.s32.totalorder %v89, %v98
    %vm114 = vcmp.eq.s32.totalorder %v90, %v98
    %vm115 = vcmp.eq.s32.totalorder %v91, %v98
    %vm116 = vcmp.eq.s32.totalorder %v92, %v98
    %vm117 = vcmp.eq.s32.totalorder %v93, %v98
    %vm118 = vcmp.eq.s32.totalorder %v94, %v98
    %vm119 = vcmp.eq.s32.totalorder %v79, %v102
    %vm120 = vcmp.eq.s32.totalorder %v80, %v102
    %vm121 = vcmp.eq.s32.totalorder %v81, %v102
    %vm122 = vcmp.eq.s32.totalorder %v82, %v102
    %vm123 = vcmp.eq.s32.totalorder %v83, %v102
    %vm124 = vcmp.eq.s32.totalorder %v84, %v102
    %vm125 = vcmp.eq.s32.totalorder %v85, %v102
    %vm126 = vcmp.eq.s32.totalorder %v86, %v102
    %vm127 = vcmp.eq.s32.totalorder %v87, %v102
    %vm128 = vcmp.eq.s32.totalorder %v88, %v102
    %vm129 = vcmp.eq.s32.totalorder %v89, %v102
    %vm130 = vcmp.eq.s32.totalorder %v90, %v102
    %vm131 = vcmp.eq.s32.totalorder %v91, %v102
    %vm132 = vcmp.eq.s32.totalorder %v92, %v102
    %vm133 = vcmp.eq.s32.totalorder %v93, %v102
    %vm134 = vcmp.eq.s32.totalorder %v94, %v102
    %v135 = vsel %vm103, 1, 0
    %v136 = vsel %vm104, 1, 0
    %v137 = vsel %vm105, 1, 0
    %v138 = vsel %vm106, 1, 0
    %v139 = vsel %vm107, 1, 0
    %v140 = vsel %vm108, 1, 0
    %v141 = vsel %vm109, 1, 0
    %v142 = vsel %vm110, 1, 0
    %v143 = vsel %vm111, 1, 0
    %v144 = vsel %vm112, 1, 0
    %v145 = vsel %vm113, 1, 0
    %v146 = vsel %vm114, 1, 0
    %v147 = vsel %vm115, 1, 0
    %v148 = vsel %vm116, 1, 0
    %v149 = vsel %vm117, 1, 0
    %v150 = vsel %vm118, 1, 0
    %v151 = vsel %vm119, 1, 0
    %v152 = vsel %vm120, 1, 0
    %v153 = vsel %vm121, 1, 0
    %v154 = vsel %vm122, 1, 0
    %v155 = vsel %vm123, 1, 0
    %v156 = vsel %vm124, 1, 0
    %v157 = vsel %vm125, 1, 0
    %v158 = vsel %vm126, 1, 0
    %v159 = vsel %vm127, 1, 0
    %v160 = vsel %vm128, 1, 0
    %v161 = vsel %vm129, 1, 0
    %v162 = vsel %vm130, 1, 0
    %v163 = vsel %vm131, 1, 0
    %v164 = vsel %vm132, 1, 0
    %v165 = vsel %vm133, 1, 0
    %v166 = vsel %vm134, 1, 0
    %v167 = vcvt.s32.f32 %v135
    %v168 = vcvt.s32.f32 %v136
    %v169 = vcvt.s32.f32 %v137
    %v170 = vcvt.s32.f32 %v138
    %v171 = vcvt.s32.f32 %v139
    %v172 = vcvt.s32.f32 %v140
    %v173 = vcvt.s32.f32 %v141
    %v174 = vcvt.s32.f32 %v142
    %v175 = vcvt.s32.f32 %v143
    %v176 = vcvt.s32.f32 %v144
    %v177 = vcvt.s32.f32 %v145
    %v178 = vcvt.s32.f32 %v146
    %v179 = vcvt.s32.f32 %v147
    %v180 = vcvt.s32.f32 %v148
    %v181 = vcvt.s32.f32 %v149
    %v182 = vcvt.s32.f32 %v150
    %v183 = vcvt.s32.f32 %v151
    %v184 = vcvt.s32.f32 %v152
    %v185 = vcvt.s32.f32 %v153
    %v186 = vcvt.s32.f32 %v154
    %v187 = vcvt.s32.f32 %v155
    %v188 = vcvt.s32.f32 %v156
    %v189 = vcvt.s32.f32 %v157
    %v190 = vcvt.s32.f32 %v158
    %v191 = vcvt.s32.f32 %v159
    %v192 = vcvt.s32.f32 %v160
    %v193 = vcvt.s32.f32 %v161
    %v194 = vcvt.s32.f32 %v162
    %v195 = vcvt.s32.f32 %v163
    %v196 = vcvt.s32.f32 %v164
    %v197 = vcvt.s32.f32 %v165
    %v198 = vcvt.s32.f32 %v166
    %v199 = vpack.c.bf16 %v168, %v167
    %v200 = vpack.c.bf16 %v170, %v169
    %v201 = vpack.c.bf16 %v172, %v171
    %v202 = vpack.c.bf16 %v174, %v173
    %v203 = vpack.c.bf16 %v176, %v175
    %v204 = vpack.c.bf16 %v178, %v177
    %v205 = vpack.c.bf16 %v180, %v179
    %v206 = vpack.c.bf16 %v182, %v181
    %v207 = vpack.c.bf16 %v184, %v183
    %v208 = vpack.c.bf16 %v186, %v185
    %v209 = vpack.c.bf16 %v188, %v187
    %v210 = vpack.c.bf16 %v190, %v189
    %v211 = vpack.c.bf16 %v192, %v191
    %v212 = vpack.c.bf16 %v194, %v193
    %v213 = vpack.c.bf16 %v196, %v195
    %v214 = vpack.c.bf16 %v198, %v197
    %v215 = vpack.c.bf16 %v69, %v69
    %v216 = vpack.c.bf16 %v71, %v71
    %217 = vmatprep.subr.bf16.mxu0 0
    %218 = vmatpush1.bf16.msra.mxu0 %v199
    %219 = vmatprep.subr.bf16.mxu0 0
    %220 = vmatpush1.bf16.msra.mxu0 %v200
    %221 = vmatprep.subr.bf16.mxu0 0
    %222 = vmatpush1.bf16.msra.mxu0 %v201
    %223 = vmatprep.subr.bf16.mxu0 0
    %224 = vmatpush1.bf16.msra.mxu0 %v202
    %225 = vmatprep.subr.bf16.mxu0 0
    %226 = vmatpush1.bf16.msra.mxu0 %v203
    %227 = vmatprep.subr.bf16.mxu0 0
    %228 = vmatpush1.bf16.msra.mxu0 %v204
    %229 = vmatprep.subr.bf16.mxu0 0
    %230 = vmatpush1.bf16.msra.mxu0 %v205
    %231 = vmatprep.subr.bf16.mxu0 0
    %232 = vmatpush1.bf16.msra.mxu0 %v206
    %233 = vmatprep.subr.bf16.mxu0 0
    %234 = vmatpush1.bf16.msra.mxu0 0
    %235 = vmatprep.subr.bf16.mxu0 0
    %236 = vmatpush1.bf16.msra.mxu0 0
    %237 = vmatprep.subr.bf16.mxu0 0
    %238 = vmatpush1.bf16.msra.mxu0 0
    %239 = vmatprep.subr.bf16.mxu0 0
    %240 = vmatpush1.bf16.msra.mxu0 0
    %241 = vmatprep.subr.bf16.mxu0 0
    %242 = vmatpush1.bf16.msra.mxu0 0
    %243 = vmatprep.subr.bf16.mxu0 0
    %244 = vmatpush1.bf16.msra.mxu0 0
    %245 = vmatprep.subr.bf16.mxu0 0
    %246 = vmatpush1.bf16.msra.mxu0 0
    %247 = vmatprep.subr.bf16.mxu0 0
    %248 = vmatpush1.bf16.msra.mxu0 0
    %249 = vmatprep.mubr.bf16.mxu0 0
    %250 = vmatmul.mubr.bf16.gmra.mrb[0].mxu0 %v215
    %v251 = vpop.f32.mrb[0].mxu0
    %v252 = vadd.f32 0.0, %v251
    %v253 = vpop.f32.mrb[0].mxu0
    %v254 = vpop.f32.mrb[0].mxu0
    %v255 = vpop.f32.mrb[0].mxu0
    %256 = vdwg.mxu0
    %257 = vmatprep.subr.bf16.mxu0 0
    %258 = vmatpush1.bf16.msra.mxu0 %v207
    %259 = vmatprep.subr.bf16.mxu0 0
    %260 = vmatpush1.bf16.msra.mxu0 %v208
    %261 = vmatprep.subr.bf16.mxu0 0
    %262 = vmatpush1.bf16.msra.mxu0 %v209
    %263 = vmatprep.subr.bf16.mxu0 0
    %264 = vmatpush1.bf16.msra.mxu0 %v210
    %265 = vmatprep.subr.bf16.mxu0 0
    %266 = vmatpush1.bf16.msra.mxu0 %v211
    %267 = vmatprep.subr.bf16.mxu0 0
    %268 = vmatpush1.bf16.msra.mxu0 %v212
    %269 = vmatprep.subr.bf16.mxu0 0
    %270 = vmatpush1.bf16.msra.mxu0 %v213
    %271 = vmatprep.subr.bf16.mxu0 0
    %272 = vmatpush1.bf16.msra.mxu0 %v214
    %273 = vmatprep.subr.bf16.mxu0 0
    %274 = vmatpush1.bf16.msra.mxu0 0
    %275 = vmatprep.subr.bf16.mxu0 0
    %276 = vmatpush1.bf16.msra.mxu0 0
    %277 = vmatprep.subr.bf16.mxu0 0
    %278 = vmatpush1.bf16.msra.mxu0 0
    %279 = vmatprep.subr.bf16.mxu0 0
    %280 = vmatpush1.bf16.msra.mxu0 0
    %281 = vmatprep.subr.bf16.mxu0 0
    %282 = vmatpush1.bf16.msra.mxu0 0
    %283 = vmatprep.subr.bf16.mxu0 0
    %284 = vmatpush1.bf16.msra.mxu0 0
    %285 = vmatprep.subr.bf16.mxu0 0
    %286 = vmatpush1.bf16.msra.mxu0 0
    %287 = vmatprep.subr.bf16.mxu0 0
    %288 = vmatpush1.bf16.msra.mxu0 0
    %289 = vmatprep.mubr.bf16.mxu0 0
    %290 = vmatmul.mubr.bf16.gmra.mrb[0].mxu0 %v216
    %v291 = vpop.f32.mrb[0].mxu0
    %v292 = vadd.f32 0.0, %v291
    %v293 = vpop.f32.mrb[0].mxu0
    %v294 = vpop.f32.mrb[0].mxu0
    %v295 = vpop.f32.mrb[0].mxu0
    %296 = vdwg.mxu0
    %v297 = vrcp.pop %v73
    %v298 = vrcp.pop %v75
    %v299 = vmul.f32 %v252, -1.0
    %v300 = vmul.f32 %v292, -1.0
    %v301 = vmul.f32 %v299, %v297
    %v302 = vmul.f32 %v300, %v298
    %v303 = vld [vmem:[#allocation5] sm:$0xff]
    %v304 = vld [vmem:[#allocation5 + $0x8] sm:$0xff]
    %v305 = vld [vmem:[#allocation7] sm:$0xff]
    %v306 = vld [vmem:[#allocation7 + $0x8] sm:$0xff]
    %308 = vset.pattern.permute.xlu0 0
    %309 = vperm.xlu0 %308, %v303
    %v310 = vpop.permute.xlu0 %309
    %313 = vset.pattern.permute.xlu0 0
    %314 = vperm.xlu0 %313, %v304
    %v315 = vpop.permute.xlu0 %314
    %v317 = vlaneseq
    %v318 = vshrl.u32 %v317, 7
    %v319 = vsub.s32 0, %v318
    %v320 = vrot.slane %v305, %v319
    %v321 = vlaneseq
    %v322 = vshrl.u32 %v321, 7
    %v323 = vsub.s32 0, %v322
    %v324 = vrot.slane %v306, %v323
    %v325 = vsub.f32 %v310, %v320
    %v326 = vsub.f32 %v315, %v324
    %v327 = vand.u32 2147483647, %v325
    %v328 = vand.u32 2147483647, %v326
    %329 = vset.pattern.permute.xlu0 1
    %330 = vperm.xlu0 %329, %v303
    %v331 = vpop.permute.xlu0 %330
    %333 = vset.pattern.permute.xlu0 1
    %334 = vperm.xlu0 %333, %v304
    %v335 = vpop.permute.xlu0 %334
    %v337 = vlaneseq
    %v338 = vshrl.u32 %v337, 7
    %v339 = vsub.s32 1, %v338
    %v340 = vrot.slane %v305, %v339
    %v341 = vlaneseq
    %v342 = vshrl.u32 %v341, 7
    %v343 = vsub.s32 1, %v342
    %v344 = vrot.slane %v306, %v343
    %v345 = vsub.f32 %v331, %v340
    %v346 = vsub.f32 %v335, %v344
    %v347 = vand.u32 2147483647, %v345
    %v348 = vand.u32 2147483647, %v346
    %v349 = vadd.f32 %v327, %v347
    %v350 = vadd.f32 %v328, %v348
    %351 = vset.pattern.permute.xlu0 2
    %352 = vperm.xlu0 %351, %v303
    %v353 = vpop.permute.xlu0 %352
    %355 = vset.pattern.permute.xlu0 2
    %356 = vperm.xlu0 %355, %v304
    %v357 = vpop.permute.xlu0 %356
    %v359 = vlaneseq
    %v360 = vshrl.u32 %v359, 7
    %v361 = vsub.s32 2, %v360
    %v362 = vrot.slane %v305, %v361
    %v363 = vlaneseq
    %v364 = vshrl.u32 %v363, 7
    %v365 = vsub.s32 2, %v364
    %v366 = vrot.slane %v306, %v365
    %v367 = vsub.f32 %v353, %v362
    %v368 = vsub.f32 %v357, %v366
    %v369 = vand.u32 2147483647, %v367
    %v370 = vand.u32 2147483647, %v368
    %v371 = vadd.f32 %v349, %v369
    %v372 = vadd.f32 %v350, %v370
    %373 = vset.pattern.permute.xlu0 3
    %374 = vperm.xlu0 %373, %v303
    %v375 = vpop.permute.xlu0 %374
    %377 = vset.pattern.permute.xlu0 3
    %378 = vperm.xlu0 %377, %v304
    %v379 = vpop.permute.xlu0 %378
    %v381 = vlaneseq
    %v382 = vshrl.u32 %v381, 7
    %v383 = vsub.s32 3, %v382
    %v384 = vrot.slane %v305, %v383
    %v385 = vlaneseq
    %v386 = vshrl.u32 %v385, 7
    %v387 = vsub.s32 3, %v386
    %v388 = vrot.slane %v306, %v387
    %v389 = vsub.f32 %v375, %v384
    %v390 = vsub.f32 %v379, %v388
    %v391 = vand.u32 2147483647, %v389
    %v392 = vand.u32 2147483647, %v390
    %v393 = vadd.f32 %v371, %v391
    %v394 = vadd.f32 %v372, %v392
    %395 = vrot.lane.b32.xlu0 %v303, 127
    %v396 = vpop.permute.xlu0 %395
    %397 = vrot.lane.b32.xlu0 %v304, 127
    %v398 = vpop.permute.xlu0 %397
    %v401 = vmul.f32 %v303, %v396
    %v402 = vmul.f32 %v304, %v398
    %v405 = vrot.slane %v305, 1
    %v406 = vrot.slane %v306, 1
    %v409 = vmul.f32 %v305, %v405
    %v410 = vmul.f32 %v306, %v406
    %411 = vset.pattern.permute.xlu0 6
    %412 = vperm.xlu0 %411, %v303
    %v413 = vpop.permute.xlu0 %412
    %415 = vset.pattern.permute.xlu0 6
    %416 = vperm.xlu0 %415, %v304
    %v417 = vpop.permute.xlu0 %416
    %v419 = vlaneseq
    %v420 = vshrl.u32 %v419, 7
    %v421 = vsub.s32 6, %v420
    %v422 = vrot.slane %v305, %v421
    %v423 = vlaneseq
    %v424 = vshrl.u32 %v423, 7
    %v425 = vsub.s32 6, %v424
    %v426 = vrot.slane %v306, %v425
    %v427 = vmin.f32 %v413, %v422
    %v428 = vmin.f32 %v417, %v426
    %429 = vset.pattern.permute.xlu0 4
    %430 = vperm.xlu0 %429, %v303
    %v431 = vpop.permute.xlu0 %430
    %433 = vset.pattern.permute.xlu0 4
    %434 = vperm.xlu0 %433, %v304
    %v435 = vpop.permute.xlu0 %434
    %v437 = vlaneseq
    %v438 = vshrl.u32 %v437, 7
    %v439 = vsub.s32 4, %v438
    %v440 = vrot.slane %v305, %v439
    %v441 = vlaneseq
    %v442 = vshrl.u32 %v441, 7
    %v443 = vsub.s32 4, %v442
    %v444 = vrot.slane %v306, %v443
    %v445 = vmax.f32 %v431, %v440
    %v446 = vmax.f32 %v435, %v444
    %v447 = vsub.f32 %v427, %v445
    %v448 = vsub.f32 %v428, %v446
    %v449 = vmax.f32 %v447, 0.0
    %v450 = vmax.f32 %v448, 0.0
    %451 = vset.pattern.permute.xlu0 7
    %452 = vperm.xlu0 %451, %v303
    %v453 = vpop.permute.xlu0 %452
    %455 = vset.pattern.permute.xlu0 7
    %456 = vperm.xlu0 %455, %v304
    %v457 = vpop.permute.xlu0 %456
    %v459 = vlaneseq
    %v460 = vshrl.u32 %v459, 7
    %v461 = vsub.s32 7, %v460
    %v462 = vrot.slane %v305, %v461
    %v463 = vlaneseq
    %v464 = vshrl.u32 %v463, 7
    %v465 = vsub.s32 7, %v464
    %v466 = vrot.slane %v306, %v465
    %v467 = vmin.f32 %v453, %v462
    %v468 = vmin.f32 %v457, %v466
    %469 = vset.pattern.permute.xlu0 5
    %470 = vperm.xlu0 %469, %v303
    %v471 = vpop.permute.xlu0 %470
    %473 = vset.pattern.permute.xlu0 5
    %474 = vperm.xlu0 %473, %v304
    %v475 = vpop.permute.xlu0 %474
    %v477 = vlaneseq
    %v478 = vshrl.u32 %v477, 7
    %v479 = vsub.s32 5, %v478
    %v480 = vrot.slane %v305, %v479
    %v481 = vlaneseq
    %v482 = vshrl.u32 %v481, 7
    %v483 = vsub.s32 5, %v482
    %v484 = vrot.slane %v306, %v483
    %v485 = vmax.f32 %v471, %v480
    %v486 = vmax.f32 %v475, %v484
    %v487 = vsub.f32 %v467, %v485
    %v488 = vsub.f32 %v468, %v486
    %v489 = vmax.f32 %v487, 0.0
    %v490 = vmax.f32 %v488, 0.0
    %v491 = vmul.f32 %v449, %v489
    %v492 = vmul.f32 %v450, %v490
    %494 = vset.pattern.permute.xlu0 2
    %495 = vperm.xlu0 %494, %v401
    %v496 = vpop.permute.xlu0 %495
    %499 = vset.pattern.permute.xlu0 2
    %500 = vperm.xlu0 %499, %v402
    %v501 = vpop.permute.xlu0 %500
    %v503 = vlaneseq
    %v504 = vshrl.u32 %v503, 7
    %v505 = vsub.s32 2, %v504
    %v506 = vrot.slane %v409, %v505
    %v507 = vlaneseq
    %v508 = vshrl.u32 %v507, 7
    %v509 = vsub.s32 2, %v508
    %v510 = vrot.slane %v410, %v509
    %v511 = vadd.f32 %v496, %v506
    %v512 = vadd.f32 %v501, %v510
    %v513 = vsub.f32 %v511, %v491
    %v514 = vsub.f32 %v512, %v492
    %v515 = vmax.f32 %v513, 1e-09
    %v516 = vmax.f32 %v514, 1e-09
    %v517 = vrcp.pop %v515
    %v518 = vrcp.pop %v516
    %v519 = vmul.f32 %v491, %v517
    %v520 = vmul.f32 %v492, %v518
    %v521 = vmax.f32 %v413, %v422
    %v522 = vmax.f32 %v417, %v426
    %v523 = vmin.f32 %v431, %v440
    %v524 = vmin.f32 %v435, %v444
    %v525 = vsub.f32 %v521, %v523
    %v526 = vsub.f32 %v522, %v524
    %v527 = vmax.f32 %v525, 0.0
    %v528 = vmax.f32 %v526, 0.0
    %v529 = vmax.f32 %v453, %v462
    %v530 = vmax.f32 %v457, %v466
    %v531 = vmin.f32 %v471, %v480
    %v532 = vmin.f32 %v475, %v484
    %v533 = vsub.f32 %v529, %v531
    %v534 = vsub.f32 %v530, %v532
    %v535 = vmax.f32 %v533, 0.0
    %v536 = vmax.f32 %v534, 0.0
    %v537 = vmul.f32 %v527, %v535
    %v538 = vmul.f32 %v528, %v536
    %v539 = vmax.f32 %v537, 1e-09
    %v540 = vmax.f32 %v538, 1e-09
    %v541 = vrcp.pop %v539
    %v542 = vrcp.pop %v540
    %v543 = vsub.f32 %v537, %v513
    %v544 = vsub.f32 %v538, %v514
    %v545 = vmul.f32 %v543, %v541
    %v546 = vmul.f32 %v544, %v542
    %v547 = vsub.f32 %v519, %v545
    %v548 = vsub.f32 %v520, %v546
    %v549 = vadd.f32 %v393, %v301
    %v550 = vadd.f32 %v394, %v302
    %v551 = vsub.f32 %v549, %v547
    %v552 = vsub.f32 %v550, %v548
    %553 = vst [vmem:[#allocation8] sm:$0xff] %v551
    %554 = vst [vmem:[#allocation8 + $0x8] sm:$0xff] %v552
    // Predicated region
    $region30: #{tpu_custom_call.1} parent=1 // pred_check
      _
    $region31: #{tpu_custom_call.1} parent=1 // pred_check_branch
      %556 = sbr.rel (0) target = $region33
    $region32: #{tpu_custom_call.1} parent=1 // pred_region
      %s558 = ssub.s32 256, 256
      %559 = vsyncadd [#allocation4], %s558
      %s560 = sshll.u32 [#allocation8], 4
      %s561 = int_to_ptr.vmem [resolvable:$true] %s560
      %566 = dma.vmem_to_hbm [thread:$0]  %s561, 256, %s4, [#allocation4], 128, 128, 8
    $region33: #{tpu_custom_call.1} parent=1 // pred_fallthru
      _
    // Predicated region
    $region34: #{tpu_custom_call.1} parent=1 // pred_check
      _
    $region35: #{tpu_custom_call.1} parent=1 // pred_check_branch
      %568 = sbr.rel (0) target = $region37
    $region36: #{tpu_custom_call.1} parent=1 // pred_region
      %569 = dma.done [#allocation4], 256
    $region37: #{tpu_custom_call.1} parent=1 // pred_fallthru
      _
    %570 = vsyncpa [#allocation3], 1
    %571 = vsyncpa [#allocation6], 1
    %572 = vsyncpa [#allocation4], 1

</llo_original>
